<compile_context>
chip_gen: v7x
topology: tpu7x:2x2x1
jax: 0.10.0
libtpu: 0.0.40
codegen_flags: <defaults>
</compile_context>

<pallas_src>
import functools

import jax
import jax.numpy as jnp
from jax.experimental import pallas as pl
from jax.experimental.pallas import tpu as pltpu

# ---- small config consistent with the AAFN args -------------------------
C_IN = 4        # args.input_c
D_MODEL = 32    # args.d_model
KSIZE = 3       # Conv1d kernel_size (circular padding=1)
SEQ_LEN = 8
BATCH = 2


def _token_embedding_kernel(x_ref, w_ref, out_ref, *, batch):
    """One MXU push + 2 XLU sublane rolls + 2 VPU adds.

    x_ref  : [L*B, C]   bf16, token-major rows (row = t*B + b)
    w_ref  : [C, 3*D]   bf16, conv taps stacked along lanes
    out_ref: [L*B, D]   f32
    """
    n_tok, d = out_ref.shape
    # Single MXU push (bf16 x bf16 -> f32 accumulation).
    p = jnp.dot(x_ref[...], w_ref[...], preferred_element_type=jnp.float32)  # [L*B, 3D]
    p0 = p[:, 0 * d:1 * d]   # tap k=0 contribution (needs token t-1)
    p1 = p[:, 1 * d:2 * d]   # tap k=1 contribution (token t)
    p2 = p[:, 2 * d:3 * d]   # tap k=2 contribution (needs token t+1)
    # Token-major rows => circular shift along L == sublane rotation of the
    # full slab by `batch` rows (wrap across the sequence boundary is exact).
    out = (pltpu.roll(p0, shift=batch, axis=0)             # P0 at token t-1
           + p1
           + pltpu.roll(p2, shift=n_tok - batch, axis=0))  # P2 at token t+1 (shift == -batch mod n_tok)
    out_ref[...] = out.astype(out_ref.dtype)


def token_embedding_forward(x, w_conv):
    """x: [B, L, C] float32; w_conv: [D, C, 3] (PyTorch Conv1d weight layout)."""
    B, L, C = x.shape
    D, C_in, K = w_conv.shape
    assert C_in == C and K == KSIZE
    # One-time host-side weight packing: w_all[c, k*D + d] = w_conv[d, c, k]
    # (taps stacked along the matmul N axis; no in-kernel concat needed).
    w_all = jnp.transpose(w_conv, (1, 2, 0)).reshape(C, K * D).astype(jnp.bfloat16)
    # Free layout plumbing: token-major rows (row = t*B + b), bf16 operands.
    x_tok = jnp.transpose(x, (1, 0, 2)).reshape(L * B, C).astype(jnp.bfloat16)

    out_tok = pl.pallas_call(
        functools.partial(_token_embedding_kernel, batch=B),
        out_shape=jax.ShapeDtypeStruct((L * B, D), jnp.float32),
        # No grid: single invocation, whole-array VMEM operands.
        in_specs=[
            pl.BlockSpec(memory_space=pltpu.MemorySpace.VMEM),
            pl.BlockSpec(memory_space=pltpu.MemorySpace.VMEM),
        ],
        out_specs=pl.BlockSpec(memory_space=pltpu.MemorySpace.VMEM),
    )(x_tok, w_all)
    # Layout plumbing back to [B, L, D].
    return jnp.transpose(out_tok.reshape(L, B, D), (1, 0, 2))


def token_embedding_reference(x, w_conv):
    """Plain-JAX reference: circular-pad then VALID conv (mirrors nn.Conv1d)."""
    x_ncl = jnp.transpose(x, (0, 2, 1))                                   # [B, C, L]
    x_pad = jnp.concatenate([x_ncl[..., -1:], x_ncl, x_ncl[..., :1]], axis=-1)
    y = jax.lax.conv_general_dilated(
        x_pad, w_conv, window_strides=(1,), padding="VALID",
        dimension_numbers=("NCH", "OIH", "NCH"),
        precision=jax.lax.Precision.HIGHEST)
    return jnp.transpose(y, (0, 2, 1))                                    # [B, L, D]


if __name__ == "__main__":
    root = jax.random.PRNGKey(0)
    k_x, k_w = jax.random.split(root, 2)

    x = jax.random.normal(k_x, (BATCH, SEQ_LEN, C_IN), jnp.float32)
    # kaiming_normal_(mode='fan_in', nonlinearity='leaky_relu'):
    #   std = sqrt(2 / fan_in), fan_in = C_IN * KSIZE
    std = (2.0 / (C_IN * KSIZE)) ** 0.5
    w_conv = std * jax.random.normal(k_w, (D_MODEL, C_IN, KSIZE), jnp.float32)

    out = token_embedding_forward(x, w_conv)
    out = jax.block_until_ready(out)
    assert out.shape == (BATCH, SEQ_LEN, D_MODEL)

    # (1) Tight check vs a same-precision reference (inputs rounded to bf16,
    #     f32 accumulation) -- catches any layout / tap-ordering / roll bug.
    x_bf = x.astype(jnp.bfloat16).astype(jnp.float32)
    w_bf = w_conv.astype(jnp.bfloat16).astype(jnp.float32)
    ref_bf = token_embedding_reference(x_bf, w_bf)
    assert jnp.allclose(out, ref_bf, atol=1e-4, rtol=1e-4), "mismatch vs bf16-input reference"

    # (2) Looser check vs the true f32 conv: documents the precision change
    #     from casting the matmul operands to bfloat16 (review item 3).
    ref = token_embedding_reference(x, w_conv)
    assert jnp.allclose(out, ref, atol=8e-2, rtol=5e-2), "mismatch vs f32 reference"

    print("KERNEL_OK")
</pallas_src>

<mosaic_0001>
module attributes {stable_mosaic.version = 11 : i64} {
  func.func @_token_embedding_kernel(%arg0: memref<16x4xbf16, #tpu.memory_space<vmem>>, %arg1: memref<4x96xbf16, #tpu.memory_space<vmem>>, %arg2: memref<16x32xf32, #tpu.memory_space<vmem>>) attributes {dimension_semantics = [], scalar_prefetch = 0 : i64, scratch_operands = 0 : i64, tpu.core_type = #tpu.core_type<tc>} {
    %c0 = arith.constant 0 : index
    %c0_0 = arith.constant 0 : index
    %0 = vector.load %arg0[%c0, %c0_0] : memref<16x4xbf16, #tpu.memory_space<vmem>>, vector<16x4xbf16>
    %c0_1 = arith.constant 0 : index
    %c0_2 = arith.constant 0 : index
    %1 = vector.load %arg1[%c0_1, %c0_2] : memref<4x96xbf16, #tpu.memory_space<vmem>>, vector<4x96xbf16>
    %cst = arith.constant dense<0.000000e+00> : vector<16x96xf32>
    %2 = tpu.matmul %0, %1, %cst {dimension_numbers = #tpu.dot_dimension_numbers<[1], [0], [0], [1], [0, 0, 1, 1], [], []>} : vector<16x4xbf16>, vector<4x96xbf16>, vector<16x96xf32> -> vector<16x96xf32>
    %3 = vector.extract_strided_slice %2 {offsets = [0, 0], sizes = [16, 32], strides = [1, 1]} : vector<16x96xf32> to vector<16x32xf32>
    %4 = vector.extract_strided_slice %2 {offsets = [0, 32], sizes = [16, 32], strides = [1, 1]} : vector<16x96xf32> to vector<16x32xf32>
    %5 = vector.extract_strided_slice %2 {offsets = [0, 64], sizes = [16, 32], strides = [1, 1]} : vector<16x96xf32> to vector<16x32xf32>
    %c2_i32 = arith.constant 2 : i32
    %6 = tpu.dynamic_rotate %3 by %c2_i32 dim 0 : vector<16x32xf32>, i32 -> vector<16x32xf32>
    %7 = arith.addf %6, %4 : vector<16x32xf32>
    %c14_i32 = arith.constant 14 : i32
    %8 = tpu.dynamic_rotate %5 by %c14_i32 dim 0 : vector<16x32xf32>, i32 -> vector<16x32xf32>
    %9 = arith.addf %7, %8 : vector<16x32xf32>
    %c0_3 = arith.constant 0 : index
    %c0_4 = arith.constant 0 : index
    %10 = vector.load %arg2[%c0_3, %c0_4] : memref<16x32xf32, #tpu.memory_space<vmem>>, vector<16x32xf32>
    tpu.vector_store %arg2[%c0_3, %c0_4], %9 {strides = array<i32>} : memref<16x32xf32, #tpu.memory_space<vmem>>, vector<16x32xf32>,
    return
  }
}

</mosaic_0001>

<llo_original>
// kernel: tpu_custom_call.1
$region0: #{tpu_custom_call.1}
  #allocation0 [shape = 'u32[]', space=smem, size = 0x4, offset = 0x4, fixed_abs, tag = 'smem constant byte address 0x4 - core index']
  #allocation1 [shape = 'u32[144,128]{1,0:T(1,128)}', space=vmem, size = 0x12000, scoped, tag = 'internal scratch']
  %s0 = inlined_call_operand.vmem [shape: bf16[16,4], index: 0, kind: input, shape index: {}]
  %s1 = inlined_call_operand.vmem [shape: bf16[4,96], index: 1, kind: input, shape index: {}]
  %s2 = inlined_call_operand.hbm [shape: f32[16,32], index: 2, kind: output, shape index: {}]
  %s3 = sld [smem:[#allocation0]]
  $region18: #{tpu_custom_call.1} parent=0
    _
  %s5 = ssub.s32 1, %s3
  %s6 = scalar_select 0, %s5, %s3
  $region1: #{tpu_custom_call.1} parent=0
    #allocation2 [shape = 'u8[8192]{0}', space=vmem, size = 0x2000, scoped, tag = 'output window, operand 0, single buffered']
    #allocation3 [shape = 's32[1]{0}', space=sflag, size = 0x4, scoped, tag = 'scoped memory for tpu_custom_call.1']
    %7 = vsyncpa [#allocation3], 0
    // Predicated region
    $region2: #{tpu_custom_call.1} parent=1 // pred_check
      _
    $region3: #{tpu_custom_call.1} parent=1 // pred_check_branch
      %9 = sbr.rel (0) target = $region5
    $region4: #{tpu_custom_call.1} parent=1 // pred_region
      _
    $region5: #{tpu_custom_call.1} parent=1 // pred_fallthru
      _
    // Predicated region
    $region6: #{tpu_custom_call.1} parent=1 // pred_check
      _
    $region7: #{tpu_custom_call.1} parent=1 // pred_check_branch
      %11 = sbr.rel (0) target = $region9
    $region8: #{tpu_custom_call.1} parent=1 // pred_region
      _
    $region9: #{tpu_custom_call.1} parent=1 // pred_fallthru
      _
    %v13 = vld [vmem:[%s0] sm:$0xf]
    %v14 = vld [vmem:[%s0 + $0x4] sm:$0xf]
    %v15 = vld [vmem:[%s1] sm:$0x3]
    %v18 = vunpack.c.l.b16 %v13
    %v19 = vunpack.c.l.b16 %v14
    %v20 = vpack.c.b16 %v19, %v18
    %vm21 = vcmask 31744
    %v23 = vsel %vm21, %v20, 0
    %vm25 = vcmask 1041408
    %v27 = vsel %vm25, %v15, 0
    %29 = vmatprep.subr.bf16.mxu0 0
    %30 = vmatpush1.bf16.msra.mxu0 %v27
    %31 = vmatprep.subr.bf16.mxu0 0
    %32 = vmatpush1.bf16.msra.mxu0 0
    %33 = vmatprep.subr.bf16.mxu0 0
    %34 = vmatpush1.bf16.msra.mxu0 0
    %35 = vmatprep.subr.bf16.mxu0 0
    %36 = vmatpush1.bf16.msra.mxu0 0
    %37 = vmatprep.subr.bf16.mxu0 0
    %38 = vmatpush1.bf16.msra.mxu0 0
    %39 = vmatprep.subr.bf16.mxu0 0
    %40 = vmatpush1.bf16.msra.mxu0 0
    %41 = vmatprep.subr.bf16.mxu0 0
    %42 = vmatpush1.bf16.msra.mxu0 0
    %43 = vmatprep.subr.bf16.mxu0 0
    %44 = vmatpush1.bf16.msra.mxu0 0
    %45 = vmatprep.subr.bf16.mxu0 0
    %46 = vmatpush1.bf16.msra.mxu0 0
    %47 = vmatprep.subr.bf16.mxu0 0
    %48 = vmatpush1.bf16.msra.mxu0 0
    %49 = vmatprep.subr.bf16.mxu0 0
    %50 = vmatpush1.bf16.msra.mxu0 0
    %51 = vmatprep.subr.bf16.mxu0 0
    %52 = vmatpush1.bf16.msra.mxu0 0
    %53 = vmatprep.subr.bf16.mxu0 0
    %54 = vmatpush1.bf16.msra.mxu0 0
    %55 = vmatprep.subr.bf16.mxu0 0
    %56 = vmatpush1.bf16.msra.mxu0 0
    %57 = vmatprep.subr.bf16.mxu0 0
    %58 = vmatpush1.bf16.msra.mxu0 0
    %59 = vmatprep.subr.bf16.mxu0 0
    %60 = vmatpush1.bf16.msra.mxu0 0
    %61 = vmatprep.mubr.bf16.mxu0 0
    %62 = vmatmul.mubr.bf16.gmra.mrb[0].mxu0 %v23
    %v63 = vpop.f32.mrb[0].mxu0
    %v64 = vadd.f32 0.0, %v63
    %v65 = vpop.f32.mrb[0].mxu0
    %v66 = vpop.f32.mrb[0].mxu0
    %v67 = vadd.f32 0.0, %v66
    %v68 = vpop.f32.mrb[0].mxu0
    %69 = vdwg.mxu0
    %v70 = vrot.slane %v64, 6
    %v71 = vrot.slane %v67, 6
    %v72 = vlaneseq
    %v73 = vshrl.u32 %v72, 7
    %vm74 = vcmp.lt.s32.totalorder %v73, 2
    %v75 = vsel %vm74, %v70, %v71
    %v76 = vsel %vm74, %v71, %v70
    %79 = vrot.lane.b32.xlu0 %v64, 96
    %v80 = vpop.permute.xlu0 %79
    %81 = vrot.lane.b32.xlu0 %v67, 96
    %v82 = vpop.permute.xlu0 %81
    %v85 = vadd.f32 %v76, %v80
    %v86 = vadd.f32 %v75, %v82
    %87 = vrot.lane.b32.xlu0 %v64, 64
    %v88 = vpop.permute.xlu0 %87
    %89 = vrot.lane.b32.xlu0 %v67, 64
    %v90 = vpop.permute.xlu0 %89
    %v93 = vrot.slane %v88, 2
    %v94 = vrot.slane %v90, 2
    %vm95 = vcmp.lt.s32.totalorder %v73, 6
    %v96 = vsel %vm95, %v93, %v94
    %v97 = vsel %vm95, %v94, %v93
    %v98 = vadd.f32 %v85, %v96
    %v99 = vadd.f32 %v86, %v97
    %vm100 = vcmask 261120
    %101 = vst.msk [vmem:[#allocation2] sm:$0xff] %vm100, %v98
    %102 = vst.msk [vmem:[#allocation2 + $0x8] sm:$0xff] %vm100, %v99
    // Predicated region
    $region10: #{tpu_custom_call.1} parent=1 // pred_check
      _
    $region11: #{tpu_custom_call.1} parent=1 // pred_check_branch
      %104 = sbr.rel (0) target = $region13
    $region12: #{tpu_custom_call.1} parent=1 // pred_region
      %s106 = ssub.s32 256, 256
      %107 = vsyncadd [#allocation3], %s106
      %s108 = sshll.u32 [#allocation2], 4
      %s109 = int_to_ptr.vmem [resolvable:$true] %s108
      %114 = dma.vmem_to_hbm [thread:$0]  %s109, 256, %s2, [#allocation3], 128, 128, 8
    $region13: #{tpu_custom_call.1} parent=1 // pred_fallthru
      _
    // Predicated region
    $region14: #{tpu_custom_call.1} parent=1 // pred_check
      _
    $region15: #{tpu_custom_call.1} parent=1 // pred_check_branch
      %116 = sbr.rel (0) target = $region17
    $region16: #{tpu_custom_call.1} parent=1 // pred_region
      %117 = dma.done [#allocation3], 256
    $region17: #{tpu_custom_call.1} parent=1 // pred_fallthru
      _
    %118 = vsyncpa [#allocation3], 1

</llo_original>
